<compile_context>
chip_gen: v6e
topology: v6e:2x2x1
jax: 0.10.0
libtpu: 0.0.40
codegen_flags: <defaults>
</compile_context>

<pallas_src>
import jax
import jax.numpy as jnp
import numpy as np
from jax.experimental import pallas as pl
from jax.experimental.pallas import tpu as pltpu

NEG_SLOPE = 0.01   # nn.LeakyReLU() default negative_slope
_PACK = 4          # spatial positions packed per matmul row (lane density)


def _up_matmul_kernel(cols_ref, w_ref, b_ref, o_ref):
    """One (batch, M-tile) block per grid step.

    cols_ref: (1, TM, P*4*Cin)   bf16 packed polyphase im2col rows
    w_ref:    (P*4*Cin, P*4*Cout) bf16 block-diagonal fused phase weights
    b_ref:    (1, P*4*Cout)      f32 bias (tiled over phases and pack)
    o_ref:    (1, TM, P*4*Cout)  bf16 packed phase-major output
    """
    acc = jnp.dot(cols_ref[0], w_ref[...],
                  preferred_element_type=jnp.float32)   # f32 accumulation
    y = acc + b_ref[...]                                # bias (f32)
    y = jnp.where(y > 0, y, NEG_SLOPE * y)              # LeakyReLU (f32)
    o_ref[0] = y.astype(o_ref.dtype)                    # bf16 writeback


def _round_up(a, b):
    return ((a + b - 1) // b) * b


def up_forward(x_nchw, w_pt, bias, *, compute_dtype=jnp.bfloat16,
               tile_positions=4096):
    """Equivalent of Up.forward.

    x_nchw: (N, Cin, H, W)
    w_pt:   (Cin, Cout, 3, 3)  -- PyTorch ConvTranspose2d weight layout
    bias:   (Cout,)
    Returns (N, Cout, 2H-1, 2W-1).
    """
    N, Cin, H, W = x_nchw.shape
    Cout = w_pt.shape[1]
    OH, OW = 2 * H - 1, 2 * W - 1
    M = H * W
    KD = 4 * Cin            # 4 polyphase taps
    G = 4 * Cout            # 4 output parity phases
    P = _PACK
    KD_P = P * KD           # packed matmul K  (= 128 for Cin=8)
    G_P = P * G             # packed matmul N  (= 256 for Cout=16)

    # ---- polyphase im2col: 4 shifted taps of the *original* input ---------
    # out[2r+ph, 2c+pw] uses only x[r(+1), c(+1)]; pad one zero row/col at
    # bottom/right so all four taps are full (H, W) slabs (extra outputs they
    # create fall outside OHxOW and are cropped).
    x = jnp.transpose(x_nchw, (0, 2, 3, 1))                  # (N, H, W, Cin)
    xp = jnp.pad(x, ((0, 0), (0, 1), (0, 1), (0, 0)))        # (N, H+1, W+1, Cin)
    tap_a = xp[:, 1:, 1:, :]      # x[r+1, c+1]
    tap_b = xp[:, 1:, :W, :]      # x[r+1, c  ]
    tap_c = xp[:, :H, 1:, :]      # x[r  , c+1]
    tap_d = xp[:, :H, :W, :]      # x[r  , c  ]
    cols = jnp.concatenate([tap_a, tap_b, tap_c, tap_d], axis=-1)
    cols = cols.reshape(N, M, KD).astype(compute_dtype)      # (N, M, 4*Cin)

    # ---- fused block weight: rows = taps [A,B,C,D], cols = phases
    # [EE | EO | OE | OO] (derived from oh = 2*ih - 1 + kh, ow = 2*iw - 1 + kw)
    wkk = lambda kh, kw: w_pt[:, :, kh, kw]                  # (Cin, Cout)
    z = jnp.zeros((Cin, Cout), w_pt.dtype)
    row_a = jnp.concatenate([z,          z,          z,          wkk(0, 0)], axis=1)
    row_b = jnp.concatenate([z,          z,          wkk(0, 1),  wkk(0, 2)], axis=1)
    row_c = jnp.concatenate([z,          wkk(1, 0),  z,          wkk(2, 0)], axis=1)
    row_d = jnp.concatenate([wkk(1, 1),  wkk(1, 2),  wkk(2, 1),  wkk(2, 2)], axis=1)
    wmat = jnp.concatenate([row_a, row_b, row_c, row_d], axis=0)   # (4Cin, 4Cout)
    # Block-diagonal over the P packed positions -> lane-dense matmul.
    wmat_p = jnp.kron(jnp.eye(P, dtype=wmat.dtype), wmat).astype(compute_dtype)

    bias_p = jnp.tile(bias.astype(jnp.float32), 4 * P).reshape(1, G_P)

    # ---- pack P positions per row, tile M across the grid -----------------
    M4 = pl.cdiv(M, P)                                   # packed rows needed
    TM = max(8, min(tile_positions // P, _round_up(M4, 8)))
    TM = _round_up(TM, 8)                                # sublane alignment
    M4_pad = _round_up(M4, TM)
    M_pad = M4_pad * P
    if M_pad != M:
        cols = jnp.pad(cols, ((0, 0), (0, M_pad - M), (0, 0)))
    cols_p = cols.reshape(N, M4_pad, KD_P)               # (N, M4_pad, 128)

    grid = (N, M4_pad // TM)
    out_phase = pl.pallas_call(
        _up_matmul_kernel,
        out_shape=jax.ShapeDtypeStruct((N, M4_pad, G_P), compute_dtype),
        grid=grid,
        in_specs=[
            pl.BlockSpec((1, TM, KD_P), lambda n, m: (n, m, 0)),
            pl.BlockSpec((KD_P, G_P), lambda n, m: (0, 0)),
            pl.BlockSpec((1, G_P), lambda n, m: (0, 0)),
        ],
        out_specs=pl.BlockSpec((1, TM, G_P), lambda n, m: (n, m, 0)),
        compiler_params=pltpu.CompilerParams(
            dimension_semantics=("parallel", "parallel"),
            vmem_limit_bytes=64 * 1024 * 1024),
    )(cols_p, wmat_p, bias_p)

    # ---- unpack + interleave phases back into NCHW spatial layout ---------
    y = out_phase.reshape(N, M_pad, G)[:, :M, :]             # (N, M, 4*Cout)
    y = y.reshape(N, H, W, 2, 2, Cout)                       # [n,r,c,ph,pw,co]
    y = jnp.transpose(y, (0, 5, 1, 3, 2, 4))                 # (N,Cout,H,2,W,2)
    y = y.reshape(N, Cout, 2 * H, 2 * W)
    return y[:, :, :OH, :OW].astype(x_nchw.dtype)


def _reference_numpy(x_nchw, w_pt, bias):
    """Independent numpy reference for ConvTranspose2d(3, 2, 1) + LeakyReLU."""
    xn = np.asarray(x_nchw, np.float32)
    wn = np.asarray(w_pt, np.float32)
    bn = np.asarray(bias, np.float32)
    N, Cin, H, W = xn.shape
    Cout, K = wn.shape[1], wn.shape[2]
    OH, OW = 2 * H - 1, 2 * W - 1
    full = np.einsum('nihw,iokl->nohwkl', xn, wn)            # (N,Cout,H,W,K,K)
    refp = np.zeros((N, Cout, OH + 2, OW + 2), np.float32)
    for kh in range(K):
        for kw in range(K):
            refp[:, :, kh:kh + 2 * H:2, kw:kw + 2 * W:2] += full[..., kh, kw]
    ref = refp[:, :, 1:1 + OH, 1:1 + OW] + bn.reshape(1, Cout, 1, 1)
    return np.where(ref > 0, ref, NEG_SLOPE * ref)


if __name__ == "__main__":
    key = jax.random.PRNGKey(0)
    k_x, k_w, k_b = jax.random.split(key, 3)

    N, Cin, Cout, H, W = 2, 8, 16, 16, 16
    x = jax.random.normal(k_x, (N, Cin, H, W), jnp.float32)
    # ConvTranspose2d weight layout: (in_channels, out_channels, kH, kW)
    w = jax.random.normal(k_w, (Cin, Cout, 3, 3), jnp.float32) * 0.1
    b = jax.random.normal(k_b, (Cout,), jnp.float32) * 0.1

    up_jit = jax.jit(up_forward)
    out = up_jit(x, w, b)
    out = jax.block_until_ready(out)

    ref = _reference_numpy(x, w, b)
    assert out.shape == ref.shape, (out.shape, ref.shape)
    # bf16 matmul operands + bf16 kernel output (f32 accumulation) -> looser
    # tolerance than pure f32.
    np.testing.assert_allclose(np.asarray(out, np.float32), ref,
                               rtol=3e-2, atol=3e-2)

    print("KERNEL_OK")
</pallas_src>

<mosaic_0001>
module attributes {stable_mosaic.version = 11 : i64} {
  func.func @_up_matmul_kernel(%arg0: i32, %arg1: i32, %arg2: memref<1x64x128xbf16, #tpu.memory_space<vmem>>, %arg3: memref<128x256xbf16, #tpu.memory_space<vmem>>, %arg4: memref<1x256xf32, #tpu.memory_space<vmem>>, %arg5: memref<1x64x256xbf16, #tpu.memory_space<vmem>>) attributes {dimension_semantics = [#tpu.dimension_semantics<parallel>, #tpu.dimension_semantics<parallel>], iteration_bounds = array<i64: 2, 1>, scalar_prefetch = 0 : i64, scratch_operands = 0 : i64, tpu.core_type = #tpu.core_type<tc>, window_params = [{transform_indices = @transform_0, window_bounds = array<i64: 1, 64, 128>}, {pipeline_mode = #tpu.pipeline_mode<synchronous>, transform_indices = @transform_1, window_bounds = array<i64: 128, 256>}, {pipeline_mode = #tpu.pipeline_mode<synchronous>, transform_indices = @transform_2, window_bounds = array<i64: 1, 256>}, {transform_indices = @transform_3, window_bounds = array<i64: 1, 64, 256>}]} {
    %c0 = arith.constant 0 : index
    %c0_0 = arith.constant 0 : index
    %c0_1 = arith.constant 0 : index
    %0 = vector.load %arg2[%c0, %c0_0, %c0_1] : memref<1x64x128xbf16, #tpu.memory_space<vmem>>, vector<1x64x128xbf16>
    %1 = vector.shape_cast %0 : vector<1x64x128xbf16> to vector<64x128xbf16>
    %c0_2 = arith.constant 0 : index
    %c0_3 = arith.constant 0 : index
    %2 = vector.load %arg3[%c0_2, %c0_3] : memref<128x256xbf16, #tpu.memory_space<vmem>>, vector<128x256xbf16>
    %cst = arith.constant dense<0.000000e+00> : vector<64x256xf32>
    %3 = tpu.matmul %1, %2, %cst {dimension_numbers = #tpu.dot_dimension_numbers<[1], [0], [0], [1], [0, 0, 1, 1], [], []>} : vector<64x128xbf16>, vector<128x256xbf16>, vector<64x256xf32> -> vector<64x256xf32>
    %c0_4 = arith.constant 0 : index
    %c0_5 = arith.constant 0 : index
    %4 = vector.load %arg4[%c0_4, %c0_5] : memref<1x256xf32, #tpu.memory_space<vmem>>, vector<1x256xf32>
    %5 = vector.broadcast %4 : vector<1x256xf32> to vector<64x256xf32>
    %6 = arith.addf %3, %5 : vector<64x256xf32>
    %cst_6 = arith.constant 0.000000e+00 : f32
    %7 = vector.broadcast %cst_6 : f32 to vector<64x256xf32>
    %8 = arith.cmpf ogt, %6, %7 : vector<64x256xf32>
    %cst_7 = arith.constant 0.00999999977 : f32
    %9 = vector.broadcast %cst_7 : f32 to vector<64x256xf32>
    %10 = arith.mulf %9, %6 : vector<64x256xf32>
    %11 = arith.select %8, %6, %10 : vector<64x256xi1>, vector<64x256xf32>
    %12 = arith.truncf %11 : vector<64x256xf32> to vector<64x256xbf16>
    %c0_8 = arith.constant 0 : index
    %c0_9 = arith.constant 0 : index
    %c0_10 = arith.constant 0 : index
    %13 = vector.load %arg5[%c0_8, %c0_9, %c0_10] : memref<1x64x256xbf16, #tpu.memory_space<vmem>>, vector<1x64x256xbf16>
    %14 = vector.shape_cast %13 : vector<1x64x256xbf16> to vector<64x256xbf16>
    %15 = vector.shape_cast %12 : vector<64x256xbf16> to vector<1x64x256xbf16>
    tpu.vector_store %arg5[%c0_8, %c0_9, %c0_10], %15 {strides = array<i32>} : memref<1x64x256xbf16, #tpu.memory_space<vmem>>, vector<1x64x256xbf16>,
    return
  }
  func.func @transform_0(%arg0: i32, %arg1: i32) -> (i32, i32, i32) {
    %c0_i32 = arith.constant 0 : i32
    %c0_i32_0 = arith.constant 0 : i32
    return %arg0, %arg1, %c0_i32 : i32, i32, i32
  }
  func.func @transform_1(%arg0: i32, %arg1: i32) -> (i32, i32) {
    %c0_i32 = arith.constant 0 : i32
    %c0_i32_0 = arith.constant 0 : i32
    %c0_i32_1 = arith.constant 0 : i32
    return %c0_i32, %c0_i32_0 : i32, i32
  }
  func.func @transform_2(%arg0: i32, %arg1: i32) -> (i32, i32) {
    %c0_i32 = arith.constant 0 : i32
    %c0_i32_0 = arith.constant 0 : i32
    %c0_i32_1 = arith.constant 0 : i32
    return %c0_i32, %c0_i32_0 : i32, i32
  }
  func.func @transform_3(%arg0: i32, %arg1: i32) -> (i32, i32, i32) {
    %c0_i32 = arith.constant 0 : i32
    %c0_i32_0 = arith.constant 0 : i32
    return %arg0, %arg1, %c0_i32 : i32, i32, i32
  }
}

</mosaic_0001>

<llo_original>
// kernel: tile.9
$region0: #{tile.9}
  %s0 = inlined_call_operand.vmem [shape: f32[16,16], index: 0, kind: input, shape index: {}]
  %s1 = inlined_call_operand.vmem [shape: f32[1,256], index: 1, kind: output, shape index: {}]
  $region1: #{tile.9} parent=0
    #allocation0 [shape = 'u8[8192]{0}', space=vmem, size = 0x2000, scoped, tag = 'scoped mem for output reshape']
    %s2 = smov 3
    %v3 = vld [vmem:[%s0] ss:$8 sm:%s2]
    %vm4 = vcmask 130048
    %5 = vst.msk [vmem:[#allocation0] ss:$8 sm:$0x3] %vm4, %v3
    %s6 = scalar_lea.vmem %s0, 7
    %s7 = smov 3
    %v8 = vld [vmem:[%s6] ss:$8 sm:%s7]
    %9 = vrot.lane.b32.xlu0 %v8, 112
    %v10 = vpop.permute.xlu0 %9
    %vm11 = vcmask 1048448
    %12 = vst.msk [vmem:[#allocation0] ss:$8 sm:$0x3] %vm11, %v10
    %s13 = scalar_lea.vmem %s0, 6
    %s14 = smov 3
    %v15 = vld [vmem:[%s13] ss:$8 sm:%s14]
    %16 = vrot.lane.b32.xlu0 %v15, 96
    %v17 = vpop.permute.xlu0 %16
    %vm18 = vcmask 917248
    %19 = vst.msk [vmem:[#allocation0] ss:$8 sm:$0x3] %vm18, %v17
    %s20 = scalar_lea.vmem %s0, 5
    %s21 = smov 3
    %v22 = vld [vmem:[%s20] ss:$8 sm:%s21]
    %23 = vrot.lane.b32.xlu0 %v22, 80
    %v24 = vpop.permute.xlu0 %23
    %vm25 = vcmask 786048
    %26 = vst.msk [vmem:[#allocation0] ss:$8 sm:$0x3] %vm25, %v24
    %s27 = scalar_lea.vmem %s0, 4
    %s28 = smov 3
    %v29 = vld [vmem:[%s27] ss:$8 sm:%s28]
    %30 = vrot.lane.b32.xlu0 %v29, 64
    %v31 = vpop.permute.xlu0 %30
    %vm32 = vcmask 654848
    %33 = vst.msk [vmem:[#allocation0] ss:$8 sm:$0x3] %vm32, %v31
    %s34 = scalar_lea.vmem %s0, 3
    %s35 = smov 3
    %v36 = vld [vmem:[%s34] ss:$8 sm:%s35]
    %37 = vrot.lane.b32.xlu0 %v36, 48
    %v38 = vpop.permute.xlu0 %37
    %vm39 = vcmask 523648
    %40 = vst.msk [vmem:[#allocation0] ss:$8 sm:$0x3] %vm39, %v38
    %s41 = scalar_lea.vmem %s0, 2
    %s42 = smov 3
    %v43 = vld [vmem:[%s41] ss:$8 sm:%s42]
    %44 = vrot.lane.b32.xlu0 %v43, 32
    %v45 = vpop.permute.xlu0 %44
    %vm46 = vcmask 392448
    %47 = vst.msk [vmem:[#allocation0] ss:$8 sm:$0x3] %vm46, %v45
    %s48 = scalar_lea.vmem %s0, 1
    %s49 = smov 3
    %v50 = vld [vmem:[%s48] ss:$8 sm:%s49]
    %51 = vrot.lane.b32.xlu0 %v50, 16
    %v52 = vpop.permute.xlu0 %51
    %vm53 = vcmask 261248
    %54 = vst.msk [vmem:[#allocation0] ss:$8 sm:$0x3] %vm53, %v52
    %s56 = sshll.u32 1, 1
    %s57 = ssub.s32 %s56, 1
    %v59 = vld [vmem:[#allocation0] sm:%s57]
    %s60 = sshll.u32 1, 1
    %s61 = ssub.s32 %s60, 1
    %62 = vst [vmem:[%s1] sm:%s61] %v59
    %s63 = scalar_lea.vmem [#allocation0], 8
    %v64 = vld [vmem:[%s63] sm:%s57]
    %s65 = sshll.u32 1, 1
    %s66 = ssub.s32 %s65, 1
    %s67 = scalar_lea.vmem %s1, 1
    %68 = vst [vmem:[%s67] sm:%s66] %v64

// kernel: tile.8
$region0: #{tile.8}
  #allocation2 [shape = 's32[1]{0}', space=sflag, size = 0x4, scoped, tag = 'scoped memory for tile.8']
  %s0 = inlined_call_operand.hbm [shape: f32[16], index: 0, kind: input, shape index: {}]
  %s1 = inlined_call_operand.vmem [shape: f32[16,16], index: 1, kind: output, shape index: {}]
  $region1: #{tile.8} parent=0
    #allocation0 [shape = 'u8[512]{0}', space=vmem, size = 0x400, scoped, tag = 'operand span for operand 0']
    #allocation1 [shape = 's32[1]{0}', space=sflag, size = 0x4, scoped, tag = 'scoped memory for tile.8']
    %2 = vsyncpa [#allocation1], 0
    // Predicated region
    $region2: #{tile.8} parent=1 // pred_check
      _
    $region3: #{tile.8} parent=1 // pred_check_branch
      %4 = sbr.rel (0) target = $region5
    $region4: #{tile.8} parent=1 // pred_region
      %s6 = ssub.s32 16, 16
      %7 = vsyncadd [#allocation1], %s6
      %s9 = sshll.u32 [#allocation0], 4
      %s10 = int_to_ptr.vmem [resolvable:$true] %s9
      %12 = dma.hbm_to_vmem [thread:$0]  %s0, 16, %s10, [#allocation1]
    $region5: #{tile.8} parent=1 // pred_fallthru
      _
    // Predicated region
    $region6: #{tile.8} parent=1 // pred_check
      _
    $region7: #{tile.8} parent=1 // pred_check_branch
      %14 = sbr.rel (0) target = $region9
    $region8: #{tile.8} parent=1 // pred_region
      %15 = dma.done [#allocation1], 16
    $region9: #{tile.8} parent=1 // pred_fallthru
      _
    %v16 = vld [vmem:[#allocation0] ss:$0 sm:$0xff]
    %17 = vst [vmem:[%s1] sm:$0xff] %v16
    %s18 = scalar_lea.vmem %s1, 8
    %19 = vst [vmem:[%s18] sm:$0xff] %v16
    %20 = vsyncpa [#allocation1], 1

// kernel: up_forward.1
$region0: #{up_forward.1}
  #allocation0 [shape = 'u32[]', space=smem, size = 0x4, offset = 0x4, fixed_abs, tag = 'smem constant byte address 0x4 - core index']
  #allocation1 [shape = 'u32[144,128]{1,0:T(1,128)}', space=vmem, size = 0x12000, scoped, tag = 'internal scratch']
  %s0 = inlined_call_operand.vmem [shape: bf16[2,64,128], index: 0, kind: input, shape index: {}]
  %s1 = inlined_call_operand.vmem [shape: bf16[128,256], index: 1, kind: input, shape index: {}]
  %s2 = inlined_call_operand.vmem [shape: f32[1,256], index: 2, kind: input, shape index: {}]
  %s3 = inlined_call_operand.vmem [shape: bf16[2,64,256], index: 3, kind: output, shape index: {}]
  %s4 = sld [smem:[#allocation0]]
  $region45: #{up_forward.1} parent=0
    _
  %s6 = ssub.s32 1, %s4
  %s7 = scalar_select 0, %s6, %s4
  loop: start=0, step=1, limit=4
  $region2: #{up_forward.1} parent=0 // loop_pre_header
    _
  $region3: #{up_forward.1} parent=0 // loop_header
    %s9 = sphi 0, %s13
    %p10 = scmp.ge.s32.totalorder %s9, 4
    %s16 = sphi 0, %s28
    %s17 = sphi 0, %s24
    %s18 = sphi 0, %s16
    %s19 = sphi 0, %s17
    %s20 = sphi 0, %s18
    %s21 = sphi 0, %s19
    %s33 = sphi 0, %s35
    %s36 = sphi 0, %s33
    %s37 = sphi 0, %s36
    %s53 = sphi 0, %s37
    %s57 = sphi 0, %s57
    %s59 = sphi 0, %s57
    %s60 = sphi 0, %s59
    %s74 = sphi 0, %s60
    %s78 = sphi 0, %s78
    %s80 = sphi 0, %s78
    %s81 = sphi 0, %s80
    %s95 = sphi 0, %s81
    %s103 = sphi 0, %s105
    %s106 = sphi 0, %s103
    %s107 = sphi 0, %s106
    %s123 = sphi 0, %s107
  $region4: #{up_forward.1} parent=0 // loop_header_branch
    %12 = sbr.rel (%p10) target = $region8
  $region5: #{up_forward.1} parent=0 // loop_body
    %s14 = ssub.s32 %s9, 1
    %s15 = ssub.s32 %s9, 2
    %s22 = sadd.s32 1, %s17
    %p23 = scmp.ge.s32.totalorder %s22, 1
    %s24 = scalar_select %p23, 0, %s22
    %s25 = sadd.s32 1, %s16
    %s26 = scalar_select %p23, %s25, %s16
    %p27 = scmp.ge.s32.totalorder %s26, 2
    %s28 = scalar_select %p27, 0, %s26
    %s29 = ssub.s32 %s16, %s28
    %s30 = ssub.s32 %s17, %s24
    %s31 = sor.u32 %s29, %s30
    %p32 = scmp.eq.s32.totalorder %s31, 0
    %s34 = sadd.s32 %s33, 1
    %s35 = scalar_select %p32, %s33, %s34
    %p38 = pneg %p32
    %p39 = scmp.eq.s32.totalorder %s9, 1
    %p40 = por %p38, %p39
    %p41 = scmp.ne.s32.totalorder %s33, %s36
    %p42 = scmp.eq.s32.totalorder %s9, 0
    %p43 = por %p41, %p42
    %p44 = scmp.ne.s32.totalorder %s33, %s36
    %p45 = scmp.eq.s32.totalorder %s14, 1
    %p46 = por %p44, %p45
    %p47 = scmp.ne.s32.totalorder %s36, %s37
    %p48 = scmp.eq.s32.totalorder %s14, 0
    %p49 = por %p47, %p48
    %p50 = scmp.ne.s32.totalorder %s36, %s37
    %p51 = scmp.eq.s32.totalorder %s15, 1
    %p52 = por %p50, %p51
    %p54 = scmp.ne.s32.totalorder %s37, %s53
    %p55 = scmp.eq.s32.totalorder %s15, 0
    %p56 = por %p54, %p55
    %s58 = sadd.s32 %s57, 1
    %p61 = scmp.eq.s32.totalorder %s9, 1
    %p62 = scmp.ne.s32.totalorder %s57, %s59
    %p63 = scmp.eq.s32.totalorder %s9, 0
    %p64 = por %p62, %p63
    %p65 = scmp.ne.s32.totalorder %s57, %s59
    %p66 = scmp.eq.s32.totalorder %s14, 1
    %p67 = por %p65, %p66
    %p68 = scmp.ne.s32.totalorder %s59, %s60
    %p69 = scmp.eq.s32.totalorder %s14, 0
    %p70 = por %p68, %p69
    %p71 = scmp.ne.s32.totalorder %s59, %s60
    %p72 = scmp.eq.s32.totalorder %s15, 1
    %p73 = por %p71, %p72
    %p75 = scmp.ne.s32.totalorder %s60, %s74
    %p76 = scmp.eq.s32.totalorder %s15, 0
    %p77 = por %p75, %p76
    %s79 = sadd.s32 %s78, 1
    %p82 = scmp.eq.s32.totalorder %s9, 1
    %p83 = scmp.ne.s32.totalorder %s78, %s80
    %p84 = scmp.eq.s32.totalorder %s9, 0
    %p85 = por %p83, %p84
    %p86 = scmp.ne.s32.totalorder %s78, %s80
    %p87 = scmp.eq.s32.totalorder %s14, 1
    %p88 = por %p86, %p87
    %p89 = scmp.ne.s32.totalorder %s80, %s81
    %p90 = scmp.eq.s32.totalorder %s14, 0
    %p91 = por %p89, %p90
    %p92 = scmp.ne.s32.totalorder %s80, %s81
    %p93 = scmp.eq.s32.totalorder %s15, 1
    %p94 = por %p92, %p93
    %p96 = scmp.ne.s32.totalorder %s81, %s95
    %p97 = scmp.eq.s32.totalorder %s15, 0
    %p98 = por %p96, %p97
    %s99 = ssub.s32 %s16, %s28
    %s100 = ssub.s32 %s17, %s24
    %s101 = sor.u32 %s99, %s100
    %p102 = scmp.eq.s32.totalorder %s101, 0
    %s104 = sadd.s32 %s103, 1
    %s105 = scalar_select %p102, %s103, %s104
    %p108 = pneg %p102
    %p109 = scmp.eq.s32.totalorder %s9, 1
    %p110 = por %p108, %p109
    %p111 = scmp.ne.s32.totalorder %s103, %s106
    %p112 = scmp.eq.s32.totalorder %s9, 0
    %p113 = por %p111, %p112
    %p114 = scmp.ne.s32.totalorder %s103, %s106
    %p115 = scmp.eq.s32.totalorder %s14, 1
    %p116 = por %p114, %p115
    %p117 = scmp.ne.s32.totalorder %s106, %s107
    %p118 = scmp.eq.s32.totalorder %s14, 0
    %p119 = por %p117, %p118
    %p120 = scmp.ne.s32.totalorder %s106, %s107
    %p121 = scmp.eq.s32.totalorder %s15, 1
    %p122 = por %p120, %p121
    %p124 = scmp.ne.s32.totalorder %s107, %s123
    %p125 = scmp.eq.s32.totalorder %s15, 0
    %p126 = por %p124, %p125
    %p127 = scmp.le.s32.totalorder 1, %s9
    %p128 = scmp.lt.s32.totalorder %s9, 3
    %p129 = pnand %p127, %p128
    %p130 = pneg %p129
    // Predicated region
    $region9: #{up_forward.1} parent=5 // pred_check
      _
    $region10: #{up_forward.1} parent=5 // pred_check_branch
      %132 = sbr.rel (%p129) target = $region12
    $region11: #{up_forward.1} parent=5 // pred_region
      %s133 = ssub.s32 %s9, 1
      // Predicated region
      $region13: #{up_forward.1} parent=11 // pred_check
        %p134 = pneg %p70
      $region14: #{up_forward.1} parent=11 // pred_check_branch
        %136 = sbr.rel (%p134) target = $region16
      $region15: #{up_forward.1} parent=11 // pred_region
        _
      $region16: #{up_forward.1} parent=11 // pred_fallthru
        _
      // Predicated region
      $region17: #{up_forward.1} parent=11 // pred_check
        %p137 = pneg %p91
      $region18: #{up_forward.1} parent=11 // pred_check_branch
        %139 = sbr.rel (%p137) target = $region20
      $region19: #{up_forward.1} parent=11 // pred_region
        _
      $region20: #{up_forward.1} parent=11 // pred_fallthru
        _
    $region12: #{up_forward.1} parent=5 // pred_fallthru
      _
    %p140 = scmp.lt.s32.totalorder %s9, 2
    // Predicated region
    $region21: #{up_forward.1} parent=5 // pred_check
      %p141 = pneg %p140
    $region22: #{up_forward.1} parent=5 // pred_check_branch
      %143 = sbr.rel (%p141) target = $region24
    $region23: #{up_forward.1} parent=5 // pred_region
      // Predicated region
      $region25: #{up_forward.1} parent=23 // pred_check
        %p144 = pneg %p43
      $region26: #{up_forward.1} parent=23 // pred_check_branch
        %146 = sbr.rel (%p144) target = $region28
      $region27: #{up_forward.1} parent=23 // pred_region
        %s147 = smul.u32 8, %s17
        %p148 = scmp.lt.s32.totalorder %s16, 1
        %s149 = scalar_select %p148, %s16, 1
        %p150 = scmp.lt.s32.totalorder %s147, 7
        %s151 = scalar_select %p150, %s147, 7
        %s152 = smul.addr %s149, 8
        %s153 = sadd.s32 %s151, %s152
        %s154 = smul.addr %s153, 4
        %s155 = scalar_lea.vmem %s0, %s154
        %s156 = smul.u32 8, %s17
      $region28: #{up_forward.1} parent=23 // pred_fallthru
        _
    $region24: #{up_forward.1} parent=5 // pred_fallthru
      _
    %p157 = scmp.le.s32.totalorder 1, %s9
    %p158 = scmp.lt.s32.totalorder %s9, 3
    %p159 = pnand %p157, %p158
    %p160 = pneg %p159
    // Predicated region
    $region29: #{up_forward.1} parent=5 // pred_check
      _
    $region30: #{up_forward.1} parent=5 // pred_check_branch
      %162 = sbr.rel (%p159) target = $region32
    $region31: #{up_forward.1} parent=5 // pred_region
      %s163 = ssub.s32 %s9, 1
      %s164 = smul.u32 8, %s19
      %p165 = scmp.lt.s32.totalorder %s18, 1
      %s166 = scalar_select %p165, %s18, 1
      %p167 = scmp.lt.s32.totalorder %s164, 7
      %s168 = scalar_select %p167, %s164, 7
      %s169 = smul.addr %s166, 8
      %s170 = sadd.s32 %s168, %s169
      %s171 = smul.addr %s170, 4
      %s172 = scalar_lea.vmem %s0, %s171
      %p173 = pneg %p49
      %p174 = pneg %p46
      %p175 = pneg %p70
      %p176 = pneg %p67
      %p177 = pneg %p91
      %p178 = pneg %p88
      %p179 = pneg %p119
      %p180 = pneg %p116
      %s181 = smul.u32 8, %s19
      %p182 = scmp.lt.s32.totalorder %s18, 1
      %s183 = scalar_select %p182, %s18, 1
      %p184 = scmp.lt.s32.totalorder %s181, 7
      %s185 = scalar_select %p184, %s181, 7
      %s186 = smul.addr %s185, 2
      %s187 = smul.addr %s183, 16
      %s188 = sadd.s32 %s186, %s187
      %s189 = smul.addr %s188, 4
      %s190 = scalar_lea.vmem %s3, %s189
      %s191 = smul.u32 8, %s19
      %p192 = scmp.lt.s32.totalorder %s18, 1
      %s193 = scalar_select %p192, %s18, 1
      %p194 = scmp.lt.s32.totalorder %s191, 7
      %s195 = scalar_select %p194, %s191, 7
      %s196 = smul.addr %s193, 8
      %s197 = sadd.s32 %s195, %s196
      %s198 = smul.addr %s197, 4
      %s199 = scalar_lea.vmem %s0, %s198
      %s200 = smul.u32 8, %s19
      %s201 = smul.u32 8, %s19
      %p202 = scmp.lt.s32.totalorder %s18, 1
      %s203 = scalar_select %p202, %s18, 1
      %p204 = scmp.lt.s32.totalorder %s201, 7
      %s205 = scalar_select %p204, %s201, 7
      %s206 = smul.addr %s205, 2
      %s207 = smul.addr %s203, 16
      %s208 = sadd.s32 %s206, %s207
      %s209 = smul.addr %s208, 4
      %s210 = scalar_lea.vmem %s3, %s209
      %s211 = smul.u32 8, %s19
      %v213 = vld [vmem:[%s199] sm:$0xf]
      %v214 = vld [vmem:[%s199 + $0x4] sm:$0xf]
      %v215 = vld [vmem:[%s199 + $0x8] sm:$0xf]
      %v216 = vld [vmem:[%s199 + $0xc] sm:$0xf]
      %v217 = vld [vmem:[%s199 + $0x10] sm:$0xf]
      %v218 = vld [vmem:[%s199 + $0x14] sm:$0xf]
      %v219 = vld [vmem:[%s199 + $0x18] sm:$0xf]
      %v220 = vld [vmem:[%s199 + $0x1c] sm:$0xf]
      %v221 = vld [vmem:[%s1] sm:$0xff]
      %v222 = vld [vmem:[%s1 + $0x8] sm:$0xff]
      %v223 = vld [vmem:[%s1 + $0x10] sm:$0xff]
      %v224 = vld [vmem:[%s1 + $0x18] sm:$0xff]
      %v225 = vld [vmem:[%s1 + $0x20] sm:$0xff]
      %v226 = vld [vmem:[%s1 + $0x28] sm:$0xff]
      %v227 = vld [vmem:[%s1 + $0x30] sm:$0xff]
      %v228 = vld [vmem:[%s1 + $0x38] sm:$0xff]
      %v229 = vld [vmem:[%s1 + $0x40] sm:$0xff]
      %v230 = vld [vmem:[%s1 + $0x48] sm:$0xff]
      %v231 = vld [vmem:[%s1 + $0x50] sm:$0xff]
      %v232 = vld [vmem:[%s1 + $0x58] sm:$0xff]
      %v233 = vld [vmem:[%s1 + $0x60] sm:$0xff]
      %v234 = vld [vmem:[%s1 + $0x68] sm:$0xff]
      %v235 = vld [vmem:[%s1 + $0x70] sm:$0xff]
      %v236 = vld [vmem:[%s1 + $0x78] sm:$0xff]
      %v237 = vld [vmem:[%s2] sm:$0x3]
      %v239 = vlaneseq
      %v240 = vshrl.u32 %v239, 7
      %v241 = vsub.s32 0, %v240
      %v242 = vrot.slane %v237, %v241
      %v243 = vlaneseq
      %v244 = vshrl.u32 %v243, 7
      %v245 = vsub.s32 1, %v244
      %v246 = vrot.slane %v237, %v245
      %v257 = vunpack.c.l.b16 %v213
      %v258 = vunpack.c.l.b16 %v214
      %v259 = vunpack.c.l.b16 %v215
      %v260 = vunpack.c.l.b16 %v216
      %v261 = vunpack.c.l.b16 %v217
      %v262 = vunpack.c.l.b16 %v218
      %v263 = vunpack.c.l.b16 %v219
      %v264 = vunpack.c.l.b16 %v220
      %v265 = vpack.c.b16 %v258, %v257
      %v266 = vpack.c.b16 %v260, %v259
      %v267 = vpack.c.b16 %v262, %v261
      %v268 = vpack.c.b16 %v264, %v263
      %v289 = vunpack.c.l.b16 %v221
      %v290 = vunpack.c.h.b16 %v221
      %v291 = vunpack.c.l.b16 %v222
      %v292 = vunpack.c.h.b16 %v222
      %v293 = vunpack.c.l.b16 %v223
      %v294 = vunpack.c.h.b16 %v223
      %v295 = vunpack.c.l.b16 %v224
      %v296 = vunpack.c.h.b16 %v224
      %v297 = vunpack.c.l.b16 %v225
      %v298 = vunpack.c.h.b16 %v225
      %v299 = vunpack.c.l.b16 %v226
      %v300 = vunpack.c.h.b16 %v226
      %v301 = vunpack.c.l.b16 %v227
      %v302 = vunpack.c.h.b16 %v227
      %v303 = vunpack.c.l.b16 %v228
      %v304 = vunpack.c.h.b16 %v228
      %v305 = vunpack.c.l.b16 %v229
      %v306 = vunpack.c.h.b16 %v229
      %v307 = vunpack.c.l.b16 %v230
      %v308 = vunpack.c.h.b16 %v230
      %v309 = vunpack.c.l.b16 %v231
      %v310 = vunpack.c.h.b16 %v231
      %v311 = vunpack.c.l.b16 %v232
      %v312 = vunpack.c.h.b16 %v232
      %v313 = vunpack.c.l.b16 %v233
      %v314 = vunpack.c.h.b16 %v233
      %v315 = vunpack.c.l.b16 %v234
      %v316 = vunpack.c.h.b16 %v234
      %v317 = vunpack.c.l.b16 %v235
      %v318 = vunpack.c.h.b16 %v235
      %v319 = vunpack.c.l.b16 %v236
      %v320 = vunpack.c.h.b16 %v236
      %v321 = vpack.c.b16 %v291, %v289
      %v322 = vpack.c.b16 %v292, %v290
      %v323 = vpack.c.b16 %v295, %v293
      %v324 = vpack.c.b16 %v296, %v294
      %v325 = vpack.c.b16 %v299, %v297
      %v326 = vpack.c.b16 %v300, %v298
      %v327 = vpack.c.b16 %v303, %v301
      %v328 = vpack.c.b16 %v304, %v302
      %v329 = vpack.c.b16 %v307, %v305
      %v330 = vpack.c.b16 %v308, %v306
      %v331 = vpack.c.b16 %v311, %v309
      %v332 = vpack.c.b16 %v312, %v310
      %v333 = vpack.c.b16 %v315, %v313
      %v334 = vpack.c.b16 %v316, %v314
      %v335 = vpack.c.b16 %v319, %v317
      %v336 = vpack.c.b16 %v320, %v318
      %353 = vmatprep.subr.bf16.mxu0 %v336
      %354 = vmatpush1.bf16.msra.mxu0 %v335
      %355 = vmatprep.subr.bf16.mxu0 %v334
      %356 = vmatpush1.bf16.msra.mxu0 %v333
      %357 = vmatprep.subr.bf16.mxu0 %v332
      %358 = vmatpush1.bf16.msra.mxu0 %v331
      %359 = vmatprep.subr.bf16.mxu0 %v330
      %360 = vmatpush1.bf16.msra.mxu0 %v329
      %361 = vmatprep.subr.bf16.mxu0 %v328
      %362 = vmatpush1.bf16.msra.mxu0 %v327
      %363 = vmatprep.subr.bf16.mxu0 %v326
      %364 = vmatpush1.bf16.msra.mxu0 %v325
      %365 = vmatprep.subr.bf16.mxu0 %v324
      %366 = vmatpush1.bf16.msra.mxu0 %v323
      %367 = vmatprep.subr.bf16.mxu0 %v322
      %368 = vmatpush1.bf16.msra.mxu0 %v321
      %369 = vmatprep.subr.bf16.mxu0 0
      %370 = vmatpush2.bf16.msra.mxu0 0
      %371 = vmatprep.subr.bf16.mxu0 0
      %372 = vmatpush2.bf16.msra.mxu0 0
      %373 = vmatprep.subr.bf16.mxu0 0
      %374 = vmatpush2.bf16.msra.mxu0 0
      %375 = vmatprep.subr.bf16.mxu0 0
      %376 = vmatpush2.bf16.msra.mxu0 0
      %377 = vmatprep.subr.bf16.mxu0 0
      %378 = vmatpush2.bf16.msra.mxu0 0
      %379 = vmatprep.subr.bf16.mxu0 0
      %380 = vmatpush2.bf16.msra.mxu0 0
      %381 = vmatprep.subr.bf16.mxu0 0
      %382 = vmatpush2.bf16.msra.mxu0 0
      %383 = vmatprep.subr.bf16.mxu0 0
      %384 = vmatpush2.bf16.msra.mxu0 0
      %385 = vmatprep.mubr.bf16.mxu0 0
      %386 = vmatmul.mubr.bf16.gmra.mxu0 %v265
      %v387 = vpop.f32.mrf.mxu0
      %v388 = vadd.f32 %v242, %v387
      %v389 = vpop.f32.mrf.mxu0
      %v390 = vadd.f32 %v246, %v389
      %v391 = vpop.f32.mrf.mxu0
      %v392 = vadd.f32 %v242, %v391
      %v393 = vpop.f32.mrf.mxu0
      %v394 = vadd.f32 %v246, %v393
      %395 = vmatprep.mubr.bf16.mxu0 0
      %396 = vmatmul.mubr.bf16.gmra.mxu0 %v266
      %v397 = vpop.f32.mrf.mxu0
      %v398 = vadd.f32 %v242, %v397
      %v399 = vpop.f32.mrf.mxu0
      %v400 = vadd.f32 %v246, %v399
      %v401 = vpop.f32.mrf.mxu0
      %v402 = vadd.f32 %v242, %v401
      %v403 = vpop.f32.mrf.mxu0
      %v404 = vadd.f32 %v246, %v403
      %405 = vmatprep.mubr.bf16.mxu0 0
      %406 = vmatmul.mubr.bf16.gmra.mxu0 %v267
      %v407 = vpop.f32.mrf.mxu0
      %v408 = vadd.f32 %v242, %v407
      %v409 = vpop.f32.mrf.mxu0
      %v410 = vadd.f32 %v246, %v409
      %v411 = vpop.f32.mrf.mxu0
      %v412 = vadd.f32 %v242, %v411
      %v413 = vpop.f32.mrf.mxu0
      %v414 = vadd.f32 %v246, %v413
      %415 = vmatprep.mubr.bf16.mxu0 0
      %416 = vmatmul.mubr.bf16.gmra.mxu0 %v268
      %v417 = vpop.f32.mrf.mxu0
      %v418 = vadd.f32 %v242, %v417
      %v419 = vpop.f32.mrf.mxu0
      %v420 = vadd.f32 %v246, %v419
      %v421 = vpop.f32.mrf.mxu0
      %v422 = vadd.f32 %v242, %v421
      %v423 = vpop.f32.mrf.mxu0
      %v424 = vadd.f32 %v246, %v423
      %425 = vdwg.mxu0
      %vm426 = vcmp.gt.f32.partialorder %v388, 0.0
      %vm427 = vcmp.gt.f32.partialorder %v390, 0.0
      %vm428 = vcmp.gt.f32.partialorder %v392, 0.0
      %vm429 = vcmp.gt.f32.partialorder %v394, 0.0
      %vm430 = vcmp.gt.f32.partialorder %v398, 0.0
      %vm431 = vcmp.gt.f32.partialorder %v400, 0.0
      %vm432 = vcmp.gt.f32.partialorder %v402, 0.0
      %vm433 = vcmp.gt.f32.partialorder %v404, 0.0
      %vm434 = vcmp.gt.f32.partialorder %v408, 0.0
      %vm435 = vcmp.gt.f32.partialorder %v410, 0.0
      %vm436 = vcmp.gt.f32.partialorder %v412, 0.0
      %vm437 = vcmp.gt.f32.partialorder %v414, 0.0
      %vm438 = vcmp.gt.f32.partialorder %v418, 0.0
      %vm439 = vcmp.gt.f32.partialorder %v420, 0.0
      %vm440 = vcmp.gt.f32.partialorder %v422, 0.0
      %vm441 = vcmp.gt.f32.partialorder %v424, 0.0
      %v442 = vmul.f32 %v388, 0.01
      %v443 = vmul.f32 %v390, 0.01
      %v444 = vmul.f32 %v392, 0.01
      %v445 = vmul.f32 %v394, 0.01
      %v446 = vmul.f32 %v398, 0.01
      %v447 = vmul.f32 %v400, 0.01
      %v448 = vmul.f32 %v402, 0.01
      %v449 = vmul.f32 %v404, 0.01
      %v450 = vmul.f32 %v408, 0.01
      %v451 = vmul.f32 %v410, 0.01
      %v452 = vmul.f32 %v412, 0.01
      %v453 = vmul.f32 %v414, 0.01
      %v454 = vmul.f32 %v418, 0.01
      %v455 = vmul.f32 %v420, 0.01
      %v456 = vmul.f32 %v422, 0.01
      %v457 = vmul.f32 %v424, 0.01
      %v458 = vsel %vm426, %v388, %v442
      %v459 = vsel %vm427, %v390, %v443
      %v460 = vsel %vm428, %v392, %v444
      %v461 = vsel %vm429, %v394, %v445
      %v462 = vsel %vm430, %v398, %v446
      %v463 = vsel %vm431, %v400, %v447
      %v464 = vsel %vm432, %v402, %v448
      %v465 = vsel %vm433, %v404, %v449
      %v466 = vsel %vm434, %v408, %v450
      %v467 = vsel %vm435, %v410, %v451
      %v468 = vsel %vm436, %v412, %v452
      %v469 = vsel %vm437, %v414, %v453
      %v470 = vsel %vm438, %v418, %v454
      %v471 = vsel %vm439, %v420, %v455
      %v472 = vsel %vm440, %v422, %v456
      %v473 = vsel %vm441, %v424, %v457
      %v474 = vpack.c.bf16 %v460, %v458
      %v475 = vpack.c.bf16 %v461, %v459
      %v476 = vpack.c.bf16 %v464, %v462
      %v477 = vpack.c.bf16 %v465, %v463
      %v478 = vpack.c.bf16 %v468, %v466
      %v479 = vpack.c.bf16 %v469, %v467
      %v480 = vpack.c.bf16 %v472, %v470
      %v481 = vpack.c.bf16 %v473, %v471
      %v490 = vunpack.c.l.b16 %v474
      %v491 = vunpack.c.l.b16 %v475
      %v492 = vunpack.c.h.b16 %v474
      %v493 = vunpack.c.h.b16 %v475
      %v494 = vunpack.c.l.b16 %v476
      %v495 = vunpack.c.l.b16 %v477
      %v496 = vunpack.c.h.b16 %v476
      %v497 = vunpack.c.h.b16 %v477
      %v498 = vunpack.c.l.b16 %v478
      %v499 = vunpack.c.l.b16 %v479
      %v500 = vunpack.c.h.b16 %v478
      %v501 = vunpack.c.h.b16 %v479
      %v502 = vunpack.c.l.b16 %v480
      %v503 = vunpack.c.l.b16 %v481
      %v504 = vunpack.c.h.b16 %v480
      %v505 = vunpack.c.h.b16 %v481
      %v506 = vpack.c.b16 %v491, %v490
      %v507 = vpack.c.b16 %v493, %v492
      %v508 = vpack.c.b16 %v495, %v494
      %v509 = vpack.c.b16 %v497, %v496
      %v510 = vpack.c.b16 %v499, %v498
      %v511 = vpack.c.b16 %v501, %v500
      %v512 = vpack.c.b16 %v503, %v502
      %v513 = vpack.c.b16 %v505, %v504
      %522 = vst [vmem:[%s210] sm:$0xff] %v506
      %523 = vst [vmem:[%s210 + $0x8] sm:$0xff] %v507
      %524 = vst [vmem:[%s210 + $0x10] sm:$0xff] %v508
      %525 = vst [vmem:[%s210 + $0x18] sm:$0xff] %v509
      %526 = vst [vmem:[%s210 + $0x20] sm:$0xff] %v510
      %527 = vst [vmem:[%s210 + $0x28] sm:$0xff] %v511
      %528 = vst [vmem:[%s210 + $0x30] sm:$0xff] %v512
      %529 = vst [vmem:[%s210 + $0x38] sm:$0xff] %v513
      %s530 = smul.u32 8, %s19
      %p531 = scmp.lt.s32.totalorder %s18, 1
      %s532 = scalar_select %p531, %s18, 1
      %p533 = scmp.lt.s32.totalorder %s530, 7
      %s534 = scalar_select %p533, %s530, 7
      %s535 = smul.addr %s534, 2
      %s536 = smul.addr %s532, 16
      %s537 = sadd.s32 %s535, %s536
      %s538 = smul.addr %s537, 4
      %s539 = scalar_lea.vmem %s3, %s538
      // Predicated region
      $region33: #{up_forward.1} parent=31 // pred_check
        %p540 = pneg %p116
      $region34: #{up_forward.1} parent=31 // pred_check_branch
        %542 = sbr.rel (%p540) target = $region36
      $region35: #{up_forward.1} parent=31 // pred_region
        %s543 = smul.u32 8, %s19
      $region36: #{up_forward.1} parent=31 // pred_fallthru
        _
    $region32: #{up_forward.1} parent=5 // pred_fallthru
      _
    %p544 = scmp.le.s32.totalorder 2, %s9
    // Predicated region
    $region37: #{up_forward.1} parent=5 // pred_check
      %p545 = pneg %p544
    $region38: #{up_forward.1} parent=5 // pred_check_branch
      %547 = sbr.rel (%p545) target = $region40
    $region39: #{up_forward.1} parent=5 // pred_region
      %s548 = ssub.s32 %s9, 2
      // Predicated region
      $region41: #{up_forward.1} parent=39 // pred_check
        %p549 = pneg %p122
      $region42: #{up_forward.1} parent=39 // pred_check_branch
        %551 = sbr.rel (%p549) target = $region44
      $region43: #{up_forward.1} parent=39 // pred_region
        %s552 = smul.u32 8, %s21
        %p553 = scmp.lt.s32.totalorder %s20, 1
        %s554 = scalar_select %p553, %s20, 1
        %p555 = scmp.lt.s32.totalorder %s552, 7
        %s556 = scalar_select %p555, %s552, 7
        %s557 = smul.addr %s556, 2
        %s558 = smul.addr %s554, 16
        %s559 = sadd.s32 %s557, %s558
        %s560 = smul.addr %s559, 4
        %s561 = scalar_lea.vmem %s3, %s560
      $region44: #{up_forward.1} parent=39 // pred_fallthru
        _
    $region40: #{up_forward.1} parent=5 // pred_fallthru
      _
  $region6: #{up_forward.1} parent=0 // loop_footer
    %s13 = sadd.s32 1, %s9
  $region7: #{up_forward.1} parent=0 // loop_footer_branch
    %8 = sbr.rel target = $region3
  $region8: #{up_forward.1} parent=0 // loop_exit
    _

</llo_original>
